<compile_context>
chip_gen: v7x
topology: tpu7x:2x2x1
jax: 0.10.0
libtpu: 0.0.40
codegen_flags: <defaults>
</compile_context>

<pallas_src>
import jax
import jax.numpy as jnp
from jax.experimental import pallas as pl
from jax.experimental.pallas import tpu as pltpu

hidden_size = 64
input_size = 100
output_size = 768


def rnn_kernel(xw_ref, whh_ref, wfc_ref, bfc_ref, out_ref):
    """Serial RNN recurrence + FC head, all data resident in VMEM.

    xw_ref : (T, B, H) pre-projected inputs (x @ W_ih^T + b_ih + b_hh), time-major
    whh_ref: (H, H)    W_hh^T
    wfc_ref: (H, O)    W_fc^T
    bfc_ref: (1, O)    b_fc
    out_ref: (B, O)
    """
    T, B, H = xw_ref.shape

    w_hh = whh_ref[...]  # hoist the recurrent-weight load out of the loop

    def step(t, h):
        # Serial critical path per timestep: one (B,H)@(H,H) MXU op + tanh (EUP).
        return jnp.tanh(
            xw_ref[t] + jnp.dot(h, w_hh, preferred_element_type=jnp.float32)
        )

    # unroll=True: T is static and small, so indices become constants and the
    # LLO scheduler sees the whole recurrence.
    h_last = jax.lax.fori_loop(
        0, T, step, jnp.zeros((B, H), jnp.float32), unroll=True
    )

    # FC head executed exactly once; output last dim (768 = 6*128) is lane-dense.
    out_ref[...] = (
        jnp.dot(h_last, wfc_ref[...], preferred_element_type=jnp.float32)
        + bfc_ref[...]
    ).astype(out_ref.dtype)


def simple_rnn_forward(x, params):
    """x: (B, T, input_size) float32 (PyTorch batch_first layout)."""
    B, T, D = x.shape
    H = params["w_hh_t"].shape[0]
    O = params["w_fc_t"].shape[1]

    # Hoisted input projection: ONE batched matmul for all timesteps, biases
    # pre-summed and folded in.  The 'tbh' output order hands the kernel a
    # leading time axis without a separate HBM transpose of x.
    xw = (
        jnp.einsum("btd,dh->tbh", x, params["w_ih_t"]) + params["b_rnn"]
    ).astype(jnp.float32)

    # TODO(synk): at large B, add a leading batch grid axis marked "parallel"
    # (v7x has 2 TensorCores) and re-derive the VMEM budget (v7x: 64 MiB
    # physical / 32 MiB default scoped); at B=2 a single resident block is best.
    return pl.pallas_call(
        rnn_kernel,
        out_shape=jax.ShapeDtypeStruct((B, O), jnp.float32),
        in_specs=[
            pl.BlockSpec(memory_space=pltpu.MemorySpace.VMEM),  # xw     (T,B,H)
            pl.BlockSpec(memory_space=pltpu.MemorySpace.VMEM),  # W_hh^T (H,H)
            pl.BlockSpec(memory_space=pltpu.MemorySpace.VMEM),  # W_fc^T (H,O)
            pl.BlockSpec(memory_space=pltpu.MemorySpace.VMEM),  # b_fc   (1,O)
        ],
        out_specs=pl.BlockSpec(memory_space=pltpu.MemorySpace.VMEM),
    )(xw, params["w_hh_t"], params["w_fc_t"], params["b_fc"])


def init_params(key, in_size, hid_size, out_size):
    """Deterministic init matching PyTorch shapes (uniform +/- 1/sqrt(fan))."""
    ks = jax.random.split(key, 6)
    s = 1.0 / jnp.sqrt(hid_size)
    w_ih = jax.random.uniform(ks[0], (hid_size, in_size), jnp.float32, -s, s)
    w_hh = jax.random.uniform(ks[1], (hid_size, hid_size), jnp.float32, -s, s)
    b_ih = jax.random.uniform(ks[2], (hid_size,), jnp.float32, -s, s)
    b_hh = jax.random.uniform(ks[3], (hid_size,), jnp.float32, -s, s)
    w_fc = jax.random.uniform(ks[4], (out_size, hid_size), jnp.float32, -s, s)
    b_fc = jax.random.uniform(ks[5], (out_size,), jnp.float32, -s, s)
    return {
        "w_ih_t": w_ih.T,                   # (in, hid)
        "w_hh_t": w_hh.T,                   # (hid, hid)
        "b_rnn": b_ih + b_hh,               # (hid,)  pre-summed RNN biases
        "w_fc_t": w_fc.T,                   # (hid, out)
        "b_fc": b_fc.reshape(1, out_size),  # (1, out)
    }


def reference_forward(x, params):
    """Pure-JAX reference (lax.scan) for correctness checking."""
    B = x.shape[0]
    H = params["w_hh_t"].shape[0]

    def step(h, x_t):
        h_new = jnp.tanh(
            x_t @ params["w_ih_t"] + params["b_rnn"] + h @ params["w_hh_t"]
        )
        return h_new, None

    h0 = jnp.zeros((B, H), jnp.float32)
    h_last, _ = jax.lax.scan(step, h0, jnp.transpose(x, (1, 0, 2)))
    return h_last @ params["w_fc_t"] + params["b_fc"]


if __name__ == "__main__":
    key = jax.random.PRNGKey(0)
    k_x, k_p = jax.random.split(key)

    B, T = 2, 8
    x = jax.random.normal(k_x, (B, T, input_size), jnp.float32)
    params = init_params(k_p, input_size, hidden_size, output_size)

    out = jax.block_until_ready(simple_rnn_forward(x, params))
    ref = reference_forward(x, params)

    assert out.shape == (B, output_size)
    assert jnp.allclose(out, ref, atol=1e-4, rtol=1e-4), (
        f"max abs diff {jnp.max(jnp.abs(out - ref))}"
    )

    print("KERNEL_OK")
</pallas_src>

<mosaic_0001>
module attributes {stable_mosaic.version = 11 : i64} {
  func.func @rnn_kernel(%arg0: memref<8x2x64xf32, #tpu.memory_space<vmem>>, %arg1: memref<64x64xf32, #tpu.memory_space<vmem>>, %arg2: memref<64x768xf32, #tpu.memory_space<vmem>>, %arg3: memref<1x768xf32, #tpu.memory_space<vmem>>, %arg4: memref<2x768xf32, #tpu.memory_space<vmem>>) attributes {dimension_semantics = [], scalar_prefetch = 0 : i64, scratch_operands = 0 : i64, tpu.core_type = #tpu.core_type<tc>} {
    %c0 = arith.constant 0 : index
    %c0_0 = arith.constant 0 : index
    %0 = vector.load %arg1[%c0, %c0_0] : memref<64x64xf32, #tpu.memory_space<vmem>>, vector<64x64xf32>
    %cst = arith.constant 0.000000e+00 : f32
    %1 = vector.broadcast %cst : f32 to vector<2x64xf32>
    %c0_i32 = arith.constant 0 : i32
    %2 = arith.index_cast %c0_i32 : i32 to index
    %c0_1 = arith.constant 0 : index
    %c0_2 = arith.constant 0 : index
    %3 = vector.load %arg0[%2, %c0_1, %c0_2] : memref<8x2x64xf32, #tpu.memory_space<vmem>>, vector<1x2x64xf32>
    %4 = vector.shape_cast %3 : vector<1x2x64xf32> to vector<2x64xf32>
    %cst_3 = arith.constant dense<0.000000e+00> : vector<2x64xf32>
    %5 = tpu.matmul %1, %0, %cst_3 {dimension_numbers = #tpu.dot_dimension_numbers<[1], [0], [0], [1], [0, 0, 1, 1], [], []>} : vector<2x64xf32>, vector<64x64xf32>, vector<2x64xf32> -> vector<2x64xf32>
    %6 = arith.addf %4, %5 : vector<2x64xf32>
    %7 = math.tanh %6 : vector<2x64xf32>
    %c1_i32 = arith.constant 1 : i32
    %8 = arith.index_cast %c1_i32 : i32 to index
    %c0_4 = arith.constant 0 : index
    %c0_5 = arith.constant 0 : index
    %9 = vector.load %arg0[%8, %c0_4, %c0_5] : memref<8x2x64xf32, #tpu.memory_space<vmem>>, vector<1x2x64xf32>
    %10 = vector.shape_cast %9 : vector<1x2x64xf32> to vector<2x64xf32>
    %cst_6 = arith.constant dense<0.000000e+00> : vector<2x64xf32>
    %11 = tpu.matmul %7, %0, %cst_6 {dimension_numbers = #tpu.dot_dimension_numbers<[1], [0], [0], [1], [0, 0, 1, 1], [], []>} : vector<2x64xf32>, vector<64x64xf32>, vector<2x64xf32> -> vector<2x64xf32>
    %12 = arith.addf %10, %11 : vector<2x64xf32>
    %13 = math.tanh %12 : vector<2x64xf32>
    %c2_i32 = arith.constant 2 : i32
    %14 = arith.index_cast %c2_i32 : i32 to index
    %c0_7 = arith.constant 0 : index
    %c0_8 = arith.constant 0 : index
    %15 = vector.load %arg0[%14, %c0_7, %c0_8] : memref<8x2x64xf32, #tpu.memory_space<vmem>>, vector<1x2x64xf32>
    %16 = vector.shape_cast %15 : vector<1x2x64xf32> to vector<2x64xf32>
    %cst_9 = arith.constant dense<0.000000e+00> : vector<2x64xf32>
    %17 = tpu.matmul %13, %0, %cst_9 {dimension_numbers = #tpu.dot_dimension_numbers<[1], [0], [0], [1], [0, 0, 1, 1], [], []>} : vector<2x64xf32>, vector<64x64xf32>, vector<2x64xf32> -> vector<2x64xf32>
    %18 = arith.addf %16, %17 : vector<2x64xf32>
    %19 = math.tanh %18 : vector<2x64xf32>
    %c3_i32 = arith.constant 3 : i32
    %20 = arith.index_cast %c3_i32 : i32 to index
    %c0_10 = arith.constant 0 : index
    %c0_11 = arith.constant 0 : index
    %21 = vector.load %arg0[%20, %c0_10, %c0_11] : memref<8x2x64xf32, #tpu.memory_space<vmem>>, vector<1x2x64xf32>
    %22 = vector.shape_cast %21 : vector<1x2x64xf32> to vector<2x64xf32>
    %cst_12 = arith.constant dense<0.000000e+00> : vector<2x64xf32>
    %23 = tpu.matmul %19, %0, %cst_12 {dimension_numbers = #tpu.dot_dimension_numbers<[1], [0], [0], [1], [0, 0, 1, 1], [], []>} : vector<2x64xf32>, vector<64x64xf32>, vector<2x64xf32> -> vector<2x64xf32>
    %24 = arith.addf %22, %23 : vector<2x64xf32>
    %25 = math.tanh %24 : vector<2x64xf32>
    %c4_i32 = arith.constant 4 : i32
    %26 = arith.index_cast %c4_i32 : i32 to index
    %c0_13 = arith.constant 0 : index
    %c0_14 = arith.constant 0 : index
    %27 = vector.load %arg0[%26, %c0_13, %c0_14] : memref<8x2x64xf32, #tpu.memory_space<vmem>>, vector<1x2x64xf32>
    %28 = vector.shape_cast %27 : vector<1x2x64xf32> to vector<2x64xf32>
    %cst_15 = arith.constant dense<0.000000e+00> : vector<2x64xf32>
    %29 = tpu.matmul %25, %0, %cst_15 {dimension_numbers = #tpu.dot_dimension_numbers<[1], [0], [0], [1], [0, 0, 1, 1], [], []>} : vector<2x64xf32>, vector<64x64xf32>, vector<2x64xf32> -> vector<2x64xf32>
    %30 = arith.addf %28, %29 : vector<2x64xf32>
    %31 = math.tanh %30 : vector<2x64xf32>
    %c5_i32 = arith.constant 5 : i32
    %32 = arith.index_cast %c5_i32 : i32 to index
    %c0_16 = arith.constant 0 : index
    %c0_17 = arith.constant 0 : index
    %33 = vector.load %arg0[%32, %c0_16, %c0_17] : memref<8x2x64xf32, #tpu.memory_space<vmem>>, vector<1x2x64xf32>
    %34 = vector.shape_cast %33 : vector<1x2x64xf32> to vector<2x64xf32>
    %cst_18 = arith.constant dense<0.000000e+00> : vector<2x64xf32>
    %35 = tpu.matmul %31, %0, %cst_18 {dimension_numbers = #tpu.dot_dimension_numbers<[1], [0], [0], [1], [0, 0, 1, 1], [], []>} : vector<2x64xf32>, vector<64x64xf32>, vector<2x64xf32> -> vector<2x64xf32>
    %36 = arith.addf %34, %35 : vector<2x64xf32>
    %37 = math.tanh %36 : vector<2x64xf32>
    %c6_i32 = arith.constant 6 : i32
    %38 = arith.index_cast %c6_i32 : i32 to index
    %c0_19 = arith.constant 0 : index
    %c0_20 = arith.constant 0 : index
    %39 = vector.load %arg0[%38, %c0_19, %c0_20] : memref<8x2x64xf32, #tpu.memory_space<vmem>>, vector<1x2x64xf32>
    %40 = vector.shape_cast %39 : vector<1x2x64xf32> to vector<2x64xf32>
    %cst_21 = arith.constant dense<0.000000e+00> : vector<2x64xf32>
    %41 = tpu.matmul %37, %0, %cst_21 {dimension_numbers = #tpu.dot_dimension_numbers<[1], [0], [0], [1], [0, 0, 1, 1], [], []>} : vector<2x64xf32>, vector<64x64xf32>, vector<2x64xf32> -> vector<2x64xf32>
    %42 = arith.addf %40, %41 : vector<2x64xf32>
    %43 = math.tanh %42 : vector<2x64xf32>
    %c7_i32 = arith.constant 7 : i32
    %44 = arith.index_cast %c7_i32 : i32 to index
    %c0_22 = arith.constant 0 : index
    %c0_23 = arith.constant 0 : index
    %45 = vector.load %arg0[%44, %c0_22, %c0_23] : memref<8x2x64xf32, #tpu.memory_space<vmem>>, vector<1x2x64xf32>
    %46 = vector.shape_cast %45 : vector<1x2x64xf32> to vector<2x64xf32>
    %cst_24 = arith.constant dense<0.000000e+00> : vector<2x64xf32>
    %47 = tpu.matmul %43, %0, %cst_24 {dimension_numbers = #tpu.dot_dimension_numbers<[1], [0], [0], [1], [0, 0, 1, 1], [], []>} : vector<2x64xf32>, vector<64x64xf32>, vector<2x64xf32> -> vector<2x64xf32>
    %48 = arith.addf %46, %47 : vector<2x64xf32>
    %49 = math.tanh %48 : vector<2x64xf32>
    %c8_i32 = arith.constant 8 : i32
    %c0_25 = arith.constant 0 : index
    %c0_26 = arith.constant 0 : index
    %50 = vector.load %arg2[%c0_25, %c0_26] : memref<64x768xf32, #tpu.memory_space<vmem>>, vector<64x768xf32>
    %cst_27 = arith.constant dense<0.000000e+00> : vector<2x768xf32>
    %51 = tpu.matmul %49, %50, %cst_27 {dimension_numbers = #tpu.dot_dimension_numbers<[1], [0], [0], [1], [0, 0, 1, 1], [], []>} : vector<2x64xf32>, vector<64x768xf32>, vector<2x768xf32> -> vector<2x768xf32>
    %c0_28 = arith.constant 0 : index
    %c0_29 = arith.constant 0 : index
    %52 = vector.load %arg3[%c0_28, %c0_29] : memref<1x768xf32, #tpu.memory_space<vmem>>, vector<1x768xf32>
    %53 = vector.broadcast %52 : vector<1x768xf32> to vector<2x768xf32>
    %54 = arith.addf %51, %53 : vector<2x768xf32>
    %c0_30 = arith.constant 0 : index
    %c0_31 = arith.constant 0 : index
    %55 = vector.load %arg4[%c0_30, %c0_31] : memref<2x768xf32, #tpu.memory_space<vmem>>, vector<2x768xf32>
    tpu.vector_store %arg4[%c0_30, %c0_31], %54 {strides = array<i32>} : memref<2x768xf32, #tpu.memory_space<vmem>>, vector<2x768xf32>,
    return
  }
}

</mosaic_0001>

<llo_original>
// kernel: tpu_custom_call.1
$region0: #{tpu_custom_call.1}
  #allocation0 [shape = 'u32[]', space=smem, size = 0x4, offset = 0x4, fixed_abs, tag = 'smem constant byte address 0x4 - core index']
  #allocation1 [shape = 'u32[144,128]{1,0:T(1,128)}', space=vmem, size = 0x12000, scoped, tag = 'internal scratch']
  %s0 = inlined_call_operand.hbm [shape: f32[8,2,64], index: 0, kind: input, shape index: {}]
  %s1 = inlined_call_operand.hbm [shape: f32[64,64], index: 1, kind: input, shape index: {}]
  %s2 = inlined_call_operand.hbm [shape: f32[64,768], index: 2, kind: input, shape index: {}]
  %s3 = inlined_call_operand.vmem [shape: f32[1,768], index: 3, kind: input, shape index: {}]
  %s4 = inlined_call_operand.hbm [shape: f32[2,768], index: 4, kind: output, shape index: {}]
  %s5 = sld [smem:[#allocation0]]
  $region38: #{tpu_custom_call.1} parent=0
    _
  %s7 = ssub.s32 1, %s5
  %s8 = scalar_select 0, %s7, %s5
  $region1: #{tpu_custom_call.1} parent=0
    #allocation2 [shape = 'u8[8192]{0}', space=vmem, size = 0x2000, scoped, tag = 'input window, operand 0, single buffered']
    #allocation3 [shape = 's32[1]{0}', space=sflag, size = 0x4, scoped, tag = 'scoped memory for tpu_custom_call.1']
    #allocation4 [shape = 's32[1]{0}', space=sflag, size = 0x4, scoped, tag = 'scoped memory for tpu_custom_call.1']
    #allocation5 [shape = 'u8[32768]{0}', space=vmem, size = 0x8000, scoped, tag = 'input window, operand 1, single buffered']
    #allocation6 [shape = 's32[1]{0}', space=sflag, size = 0x4, scoped, tag = 'scoped memory for tpu_custom_call.1']
    #allocation7 [shape = 'u8[196608]{0}', space=vmem, size = 0x30000, scoped, tag = 'input window, operand 2, single buffered']
    #allocation8 [shape = 'u8[6144]{0}', space=vmem, size = 0x1800, scoped, tag = 'output window, operand 0, single buffered']
    %9 = vsyncpa [#allocation3], 0
    %10 = vsyncpa [#allocation6], 0
    %11 = vsyncpa [#allocation4], 0
    // Predicated region
    $region2: #{tpu_custom_call.1} parent=1 // pred_check
      _
    $region3: #{tpu_custom_call.1} parent=1 // pred_check_branch
      %13 = sbr.rel (0) target = $region5
    $region4: #{tpu_custom_call.1} parent=1 // pred_region
      %s15 = ssub.s32 256, 256
      %16 = vsyncadd [#allocation3], %s15
      %s17 = sshll.u32 [#allocation2], 4
      %s18 = int_to_ptr.vmem [resolvable:$true] %s17
      %23 = dma.hbm_to_vmem [thread:$0]  %s0, 256, %s18, [#allocation3], 32, 32, 2
    $region5: #{tpu_custom_call.1} parent=1 // pred_fallthru
      _
    // Predicated region
    $region6: #{tpu_custom_call.1} parent=1 // pred_check
      _
    $region7: #{tpu_custom_call.1} parent=1 // pred_check_branch
      %25 = sbr.rel (0) target = $region9
    $region8: #{tpu_custom_call.1} parent=1 // pred_region
      %s27 = ssub.s32 1024, 1024
      %28 = vsyncadd [#allocation6], %s27
      %s29 = sshll.u32 [#allocation5], 4
      %s30 = int_to_ptr.vmem [resolvable:$true] %s29
      %35 = dma.hbm_to_vmem [thread:$0]  %s1, 1024, %s30, [#allocation6], 128, 128, 8
    $region9: #{tpu_custom_call.1} parent=1 // pred_fallthru
      _
    // Predicated region
    $region10: #{tpu_custom_call.1} parent=1 // pred_check
      _
    $region11: #{tpu_custom_call.1} parent=1 // pred_check_branch
      %37 = sbr.rel (0) target = $region13
    $region12: #{tpu_custom_call.1} parent=1 // pred_region
      %s39 = ssub.s32 6144, 6144
      %40 = vsyncadd [#allocation6], %s39
      %s41 = sshll.u32 [#allocation7], 4
      %s42 = int_to_ptr.vmem [resolvable:$true] %s41
      %47 = dma.hbm_to_vmem [thread:$0]  %s2, 6144, %s42, [#allocation6], 768, 768, 48
    $region13: #{tpu_custom_call.1} parent=1 // pred_fallthru
      _
    // Predicated region
    $region14: #{tpu_custom_call.1} parent=1 // pred_check
      _
    $region15: #{tpu_custom_call.1} parent=1 // pred_check_branch
      %49 = sbr.rel (0) target = $region17
    $region16: #{tpu_custom_call.1} parent=1 // pred_region
      _
    $region17: #{tpu_custom_call.1} parent=1 // pred_fallthru
      _
    // Predicated region
    $region18: #{tpu_custom_call.1} parent=1 // pred_check
      _
    $region19: #{tpu_custom_call.1} parent=1 // pred_check_branch
      %51 = sbr.rel (0) target = $region21
    $region20: #{tpu_custom_call.1} parent=1 // pred_region
      %52 = dma.done [#allocation3], 256
    $region21: #{tpu_custom_call.1} parent=1 // pred_fallthru
      _
    // Predicated region
    $region22: #{tpu_custom_call.1} parent=1 // pred_check
      _
    $region23: #{tpu_custom_call.1} parent=1 // pred_check_branch
      %54 = sbr.rel (0) target = $region25
    $region24: #{tpu_custom_call.1} parent=1 // pred_region
      %55 = dma.done [#allocation6], 1024
    $region25: #{tpu_custom_call.1} parent=1 // pred_fallthru
      _
    // Predicated region
    $region26: #{tpu_custom_call.1} parent=1 // pred_check
      _
    $region27: #{tpu_custom_call.1} parent=1 // pred_check_branch
      %57 = sbr.rel (0) target = $region29
    $region28: #{tpu_custom_call.1} parent=1 // pred_region
      %58 = dma.done [#allocation6], 6144
    $region29: #{tpu_custom_call.1} parent=1 // pred_fallthru
      _
    %v59 = vld [vmem:[#allocation5] sm:$0xff]
    %v60 = vld [vmem:[#allocation5 + $0x8] sm:$0xff]
    %v61 = vld [vmem:[#allocation5 + $0x10] sm:$0xff]
    %v62 = vld [vmem:[#allocation5 + $0x18] sm:$0xff]
    %v63 = vld [vmem:[#allocation5 + $0x20] sm:$0xff]
    %v64 = vld [vmem:[#allocation5 + $0x28] sm:$0xff]
    %v65 = vld [vmem:[#allocation5 + $0x30] sm:$0xff]
    %v66 = vld [vmem:[#allocation5 + $0x38] sm:$0xff]
    %v67 = vld [vmem:[#allocation2] sm:$0x3]
    %vm68 = vcmask 523264
    %v70 = vsel %vm68, 0.0, 0
    %72 = vmatprep.subr.mxu0 0.0
    %73 = vmatpush1.msra.mxu0 %v59
    %74 = vmatprep.subr.mxu0 0.0
    %75 = vmatpush1.msra.mxu0 %v60
    %76 = vmatprep.subr.mxu0 0.0
    %77 = vmatpush1.msra.mxu0 %v61
    %78 = vmatprep.subr.mxu0 0.0
    %79 = vmatpush1.msra.mxu0 %v62
    %80 = vmatprep.subr.mxu0 0.0
    %81 = vmatpush1.msra.mxu0 %v63
    %82 = vmatprep.subr.mxu0 0.0
    %83 = vmatpush1.msra.mxu0 %v64
    %84 = vmatprep.subr.mxu0 0.0
    %85 = vmatpush1.msra.mxu0 %v65
    %86 = vmatprep.subr.mxu0 0.0
    %87 = vmatpush1.msra.mxu0 %v66
    %88 = vmatprep.subr.mxu0 0.0
    %89 = vmatpush1.msra.mxu0 0.0
    %90 = vmatprep.subr.mxu0 0.0
    %91 = vmatpush1.msra.mxu0 0.0
    %92 = vmatprep.subr.mxu0 0.0
    %93 = vmatpush1.msra.mxu0 0.0
    %94 = vmatprep.subr.mxu0 0.0
    %95 = vmatpush1.msra.mxu0 0.0
    %96 = vmatprep.subr.mxu0 0.0
    %97 = vmatpush1.msra.mxu0 0.0
    %98 = vmatprep.subr.mxu0 0.0
    %99 = vmatpush1.msra.mxu0 0.0
    %100 = vmatprep.subr.mxu0 0.0
    %101 = vmatpush1.msra.mxu0 0.0
    %102 = vmatprep.subr.mxu0 0.0
    %103 = vmatpush1.msra.mxu0 0.0
    %104 = vmatprep.subr.mxu0 0.0
    %105 = vmatpush1.msra.mxu0 0.0
    %106 = vmatprep.subr.mxu0 0.0
    %107 = vmatpush1.msra.mxu0 0.0
    %108 = vmatprep.subr.mxu0 0.0
    %109 = vmatpush1.msra.mxu0 0.0
    %110 = vmatprep.subr.mxu0 0.0
    %111 = vmatpush1.msra.mxu0 0.0
    %112 = vmatprep.subr.mxu0 0.0
    %113 = vmatpush1.msra.mxu0 0.0
    %114 = vmatprep.subr.mxu0 0.0
    %115 = vmatpush1.msra.mxu0 0.0
    %116 = vmatprep.subr.mxu0 0.0
    %117 = vmatpush1.msra.mxu0 0.0
    %118 = vmatprep.subr.mxu0 0.0
    %119 = vmatpush1.msra.mxu0 0.0
    %120 = vmatprep.subr.mxu0 0.0
    %121 = vmatpush1.msra.mxu0 0.0
    %122 = vmatprep.subr.mxu0 0.0
    %123 = vmatpush1.msra.mxu0 0.0
    %124 = vmatprep.subr.mxu0 0.0
    %125 = vmatpush1.msra.mxu0 0.0
    %126 = vmatprep.subr.mxu0 0.0
    %127 = vmatpush1.msra.mxu0 0.0
    %128 = vmatprep.subr.mxu0 0.0
    %129 = vmatpush1.msra.mxu0 0.0
    %130 = vmatprep.subr.mxu0 0.0
    %131 = vmatpush1.msra.mxu0 0.0
    %132 = vmatprep.subr.mxu0 0.0
    %133 = vmatpush1.msra.mxu0 0.0
    %134 = vmatprep.subr.mxu0 0.0
    %135 = vmatpush1.msra.mxu0 0.0
    %136 = vmatprep.mubr.f32.mxu0 0.0
    %137 = vmatmul.mubr.f32.gmra.mrb[0].mxu0 %v70
    %v138 = vpop.f32.mrb[0].mxu0
    %v139 = vadd.f32 0.0, %v138
    %v140 = vpop.f32.mrb[0].mxu0
    %141 = vdwg.mxu0
    %v142 = vadd.f32 %v67, %v139
    %v143 = vtanh.pop %v142
    %s144 = scalar_lea.vmem [#allocation2], 2
    %v145 = vld [vmem:[%s144] sm:$0x3]
    %v147 = vsel %vm68, %v143, 0
    %149 = vmatprep.subr.mxu0 0.0
    %150 = vmatpush1.msra.mxu0 %v59
    %151 = vmatprep.subr.mxu0 0.0
    %152 = vmatpush1.msra.mxu0 %v60
    %153 = vmatprep.subr.mxu0 0.0
    %154 = vmatpush1.msra.mxu0 %v61
    %155 = vmatprep.subr.mxu0 0.0
    %156 = vmatpush1.msra.mxu0 %v62
    %157 = vmatprep.subr.mxu0 0.0
    %158 = vmatpush1.msra.mxu0 %v63
    %159 = vmatprep.subr.mxu0 0.0
    %160 = vmatpush1.msra.mxu0 %v64
    %161 = vmatprep.subr.mxu0 0.0
    %162 = vmatpush1.msra.mxu0 %v65
    %163 = vmatprep.subr.mxu0 0.0
    %164 = vmatpush1.msra.mxu0 %v66
    %165 = vmatprep.subr.mxu0 0.0
    %166 = vmatpush1.msra.mxu0 0.0
    %167 = vmatprep.subr.mxu0 0.0
    %168 = vmatpush1.msra.mxu0 0.0
    %169 = vmatprep.subr.mxu0 0.0
    %170 = vmatpush1.msra.mxu0 0.0
    %171 = vmatprep.subr.mxu0 0.0
    %172 = vmatpush1.msra.mxu0 0.0
    %173 = vmatprep.subr.mxu0 0.0
    %174 = vmatpush1.msra.mxu0 0.0
    %175 = vmatprep.subr.mxu0 0.0
    %176 = vmatpush1.msra.mxu0 0.0
    %177 = vmatprep.subr.mxu0 0.0
    %178 = vmatpush1.msra.mxu0 0.0
    %179 = vmatprep.subr.mxu0 0.0
    %180 = vmatpush1.msra.mxu0 0.0
    %181 = vmatprep.subr.mxu0 0.0
    %182 = vmatpush1.msra.mxu0 0.0
    %183 = vmatprep.subr.mxu0 0.0
    %184 = vmatpush1.msra.mxu0 0.0
    %185 = vmatprep.subr.mxu0 0.0
    %186 = vmatpush1.msra.mxu0 0.0
    %187 = vmatprep.subr.mxu0 0.0
    %188 = vmatpush1.msra.mxu0 0.0
    %189 = vmatprep.subr.mxu0 0.0
    %190 = vmatpush1.msra.mxu0 0.0
    %191 = vmatprep.subr.mxu0 0.0
    %192 = vmatpush1.msra.mxu0 0.0
    %193 = vmatprep.subr.mxu0 0.0
    %194 = vmatpush1.msra.mxu0 0.0
    %195 = vmatprep.subr.mxu0 0.0
    %196 = vmatpush1.msra.mxu0 0.0
    %197 = vmatprep.subr.mxu0 0.0
    %198 = vmatpush1.msra.mxu0 0.0
    %199 = vmatprep.subr.mxu0 0.0
    %200 = vmatpush1.msra.mxu0 0.0
    %201 = vmatprep.subr.mxu0 0.0
    %202 = vmatpush1.msra.mxu0 0.0
    %203 = vmatprep.subr.mxu0 0.0
    %204 = vmatpush1.msra.mxu0 0.0
    %205 = vmatprep.subr.mxu0 0.0
    %206 = vmatpush1.msra.mxu0 0.0
    %207 = vmatprep.subr.mxu0 0.0
    %208 = vmatpush1.msra.mxu0 0.0
    %209 = vmatprep.subr.mxu0 0.0
    %210 = vmatpush1.msra.mxu0 0.0
    %211 = vmatprep.subr.mxu0 0.0
    %212 = vmatpush1.msra.mxu0 0.0
    %213 = vmatprep.mubr.f32.mxu0 0.0
    %214 = vmatmul.mubr.f32.gmra.mrb[0].mxu0 %v147
    %v215 = vpop.f32.mrb[0].mxu0
    %v216 = vadd.f32 0.0, %v215
    %v217 = vpop.f32.mrb[0].mxu0
    %218 = vdwg.mxu0
    %v219 = vadd.f32 %v145, %v216
    %v220 = vtanh.pop %v219
    %s221 = scalar_lea.vmem [#allocation2], 4
    %v222 = vld [vmem:[%s221] sm:$0x3]
    %v224 = vsel %vm68, %v220, 0
    %226 = vmatprep.subr.mxu0 0.0
    %227 = vmatpush1.msra.mxu0 %v59
    %228 = vmatprep.subr.mxu0 0.0
    %229 = vmatpush1.msra.mxu0 %v60
    %230 = vmatprep.subr.mxu0 0.0
    %231 = vmatpush1.msra.mxu0 %v61
    %232 = vmatprep.subr.mxu0 0.0
    %233 = vmatpush1.msra.mxu0 %v62
    %234 = vmatprep.subr.mxu0 0.0
    %235 = vmatpush1.msra.mxu0 %v63
    %236 = vmatprep.subr.mxu0 0.0
    %237 = vmatpush1.msra.mxu0 %v64
    %238 = vmatprep.subr.mxu0 0.0
    %239 = vmatpush1.msra.mxu0 %v65
    %240 = vmatprep.subr.mxu0 0.0
    %241 = vmatpush1.msra.mxu0 %v66
    %242 = vmatprep.subr.mxu0 0.0
    %243 = vmatpush1.msra.mxu0 0.0
    %244 = vmatprep.subr.mxu0 0.0
    %245 = vmatpush1.msra.mxu0 0.0
    %246 = vmatprep.subr.mxu0 0.0
    %247 = vmatpush1.msra.mxu0 0.0
    %248 = vmatprep.subr.mxu0 0.0
    %249 = vmatpush1.msra.mxu0 0.0
    %250 = vmatprep.subr.mxu0 0.0
    %251 = vmatpush1.msra.mxu0 0.0
    %252 = vmatprep.subr.mxu0 0.0
    %253 = vmatpush1.msra.mxu0 0.0
    %254 = vmatprep.subr.mxu0 0.0
    %255 = vmatpush1.msra.mxu0 0.0
    %256 = vmatprep.subr.mxu0 0.0
    %257 = vmatpush1.msra.mxu0 0.0
    %258 = vmatprep.subr.mxu0 0.0
    %259 = vmatpush1.msra.mxu0 0.0
    %260 = vmatprep.subr.mxu0 0.0
    %261 = vmatpush1.msra.mxu0 0.0
    %262 = vmatprep.subr.mxu0 0.0
    %263 = vmatpush1.msra.mxu0 0.0
    %264 = vmatprep.subr.mxu0 0.0
    %265 = vmatpush1.msra.mxu0 0.0
    %266 = vmatprep.subr.mxu0 0.0
    %267 = vmatpush1.msra.mxu0 0.0
    %268 = vmatprep.subr.mxu0 0.0
    %269 = vmatpush1.msra.mxu0 0.0
    %270 = vmatprep.subr.mxu0 0.0
    %271 = vmatpush1.msra.mxu0 0.0
    %272 = vmatprep.subr.mxu0 0.0
    %273 = vmatpush1.msra.mxu0 0.0
    %274 = vmatprep.subr.mxu0 0.0
    %275 = vmatpush1.msra.mxu0 0.0
    %276 = vmatprep.subr.mxu0 0.0
    %277 = vmatpush1.msra.mxu0 0.0
    %278 = vmatprep.subr.mxu0 0.0
    %279 = vmatpush1.msra.mxu0 0.0
    %280 = vmatprep.subr.mxu0 0.0
    %281 = vmatpush1.msra.mxu0 0.0
    %282 = vmatprep.subr.mxu0 0.0
    %283 = vmatpush1.msra.mxu0 0.0
    %284 = vmatprep.subr.mxu0 0.0
    %285 = vmatpush1.msra.mxu0 0.0
    %286 = vmatprep.subr.mxu0 0.0
    %287 = vmatpush1.msra.mxu0 0.0
    %288 = vmatprep.subr.mxu0 0.0
    %289 = vmatpush1.msra.mxu0 0.0
    %290 = vmatprep.mubr.f32.mxu0 0.0
    %291 = vmatmul.mubr.f32.gmra.mrb[0].mxu0 %v224
    %v292 = vpop.f32.mrb[0].mxu0
    %v293 = vadd.f32 0.0, %v292
    %v294 = vpop.f32.mrb[0].mxu0
    %295 = vdwg.mxu0
    %v296 = vadd.f32 %v222, %v293
    %v297 = vtanh.pop %v296
    %s298 = scalar_lea.vmem [#allocation2], 6
    %v299 = vld [vmem:[%s298] sm:$0x3]
    %v301 = vsel %vm68, %v297, 0
    %303 = vmatprep.subr.mxu0 0.0
    %304 = vmatpush1.msra.mxu0 %v59
    %305 = vmatprep.subr.mxu0 0.0
    %306 = vmatpush1.msra.mxu0 %v60
    %307 = vmatprep.subr.mxu0 0.0
    %308 = vmatpush1.msra.mxu0 %v61
    %309 = vmatprep.subr.mxu0 0.0
    %310 = vmatpush1.msra.mxu0 %v62
    %311 = vmatprep.subr.mxu0 0.0
    %312 = vmatpush1.msra.mxu0 %v63
    %313 = vmatprep.subr.mxu0 0.0
    %314 = vmatpush1.msra.mxu0 %v64
    %315 = vmatprep.subr.mxu0 0.0
    %316 = vmatpush1.msra.mxu0 %v65
    %317 = vmatprep.subr.mxu0 0.0
    %318 = vmatpush1.msra.mxu0 %v66
    %319 = vmatprep.subr.mxu0 0.0
    %320 = vmatpush1.msra.mxu0 0.0
    %321 = vmatprep.subr.mxu0 0.0
    %322 = vmatpush1.msra.mxu0 0.0
    %323 = vmatprep.subr.mxu0 0.0
    %324 = vmatpush1.msra.mxu0 0.0
    %325 = vmatprep.subr.mxu0 0.0
    %326 = vmatpush1.msra.mxu0 0.0
    %327 = vmatprep.subr.mxu0 0.0
    %328 = vmatpush1.msra.mxu0 0.0
    %329 = vmatprep.subr.mxu0 0.0
    %330 = vmatpush1.msra.mxu0 0.0
    %331 = vmatprep.subr.mxu0 0.0
    %332 = vmatpush1.msra.mxu0 0.0
    %333 = vmatprep.subr.mxu0 0.0
    %334 = vmatpush1.msra.mxu0 0.0
    %335 = vmatprep.subr.mxu0 0.0
    %336 = vmatpush1.msra.mxu0 0.0
    %337 = vmatprep.subr.mxu0 0.0
    %338 = vmatpush1.msra.mxu0 0.0
    %339 = vmatprep.subr.mxu0 0.0
    %340 = vmatpush1.msra.mxu0 0.0
    %341 = vmatprep.subr.mxu0 0.0
    %342 = vmatpush1.msra.mxu0 0.0
    %343 = vmatprep.subr.mxu0 0.0
    %344 = vmatpush1.msra.mxu0 0.0
    %345 = vmatprep.subr.mxu0 0.0
    %346 = vmatpush1.msra.mxu0 0.0
    %347 = vmatprep.subr.mxu0 0.0
    %348 = vmatpush1.msra.mxu0 0.0
    %349 = vmatprep.subr.mxu0 0.0
    %350 = vmatpush1.msra.mxu0 0.0
    %351 = vmatprep.subr.mxu0 0.0
    %352 = vmatpush1.msra.mxu0 0.0
    %353 = vmatprep.subr.mxu0 0.0
    %354 = vmatpush1.msra.mxu0 0.0
    %355 = vmatprep.subr.mxu0 0.0
    %356 = vmatpush1.msra.mxu0 0.0
    %357 = vmatprep.subr.mxu0 0.0
    %358 = vmatpush1.msra.mxu0 0.0
    %359 = vmatprep.subr.mxu0 0.0
    %360 = vmatpush1.msra.mxu0 0.0
    %361 = vmatprep.subr.mxu0 0.0
    %362 = vmatpush1.msra.mxu0 0.0
    %363 = vmatprep.subr.mxu0 0.0
    %364 = vmatpush1.msra.mxu0 0.0
    %365 = vmatprep.subr.mxu0 0.0
    %366 = vmatpush1.msra.mxu0 0.0
    %367 = vmatprep.mubr.f32.mxu0 0.0
    %368 = vmatmul.mubr.f32.gmra.mrb[0].mxu0 %v301
    %v369 = vpop.f32.mrb[0].mxu0
    %v370 = vadd.f32 0.0, %v369
    %v371 = vpop.f32.mrb[0].mxu0
    %372 = vdwg.mxu0
    %v373 = vadd.f32 %v299, %v370
    %v374 = vtanh.pop %v373
    %s375 = scalar_lea.vmem [#allocation2], 8
    %v376 = vld [vmem:[%s375] sm:$0x3]
    %v378 = vsel %vm68, %v374, 0
    %380 = vmatprep.subr.mxu0 0.0
    %381 = vmatpush1.msra.mxu0 %v59
    %382 = vmatprep.subr.mxu0 0.0
    %383 = vmatpush1.msra.mxu0 %v60
    %384 = vmatprep.subr.mxu0 0.0
    %385 = vmatpush1.msra.mxu0 %v61
    %386 = vmatprep.subr.mxu0 0.0
    %387 = vmatpush1.msra.mxu0 %v62
    %388 = vmatprep.subr.mxu0 0.0
    %389 = vmatpush1.msra.mxu0 %v63
    %390 = vmatprep.subr.mxu0 0.0
    %391 = vmatpush1.msra.mxu0 %v64
    %392 = vmatprep.subr.mxu0 0.0
    %393 = vmatpush1.msra.mxu0 %v65
    %394 = vmatprep.subr.mxu0 0.0
    %395 = vmatpush1.msra.mxu0 %v66
    %396 = vmatprep.subr.mxu0 0.0
    %397 = vmatpush1.msra.mxu0 0.0
    %398 = vmatprep.subr.mxu0 0.0
    %399 = vmatpush1.msra.mxu0 0.0
    %400 = vmatprep.subr.mxu0 0.0
    %401 = vmatpush1.msra.mxu0 0.0
    %402 = vmatprep.subr.mxu0 0.0
    %403 = vmatpush1.msra.mxu0 0.0
    %404 = vmatprep.subr.mxu0 0.0
    %405 = vmatpush1.msra.mxu0 0.0
    %406 = vmatprep.subr.mxu0 0.0
    %407 = vmatpush1.msra.mxu0 0.0
    %408 = vmatprep.subr.mxu0 0.0
    %409 = vmatpush1.msra.mxu0 0.0
    %410 = vmatprep.subr.mxu0 0.0
    %411 = vmatpush1.msra.mxu0 0.0
    %412 = vmatprep.subr.mxu0 0.0
    %413 = vmatpush1.msra.mxu0 0.0
    %414 = vmatprep.subr.mxu0 0.0
    %415 = vmatpush1.msra.mxu0 0.0
    %416 = vmatprep.subr.mxu0 0.0
    %417 = vmatpush1.msra.mxu0 0.0
    %418 = vmatprep.subr.mxu0 0.0
    %419 = vmatpush1.msra.mxu0 0.0
    %420 = vmatprep.subr.mxu0 0.0
    %421 = vmatpush1.msra.mxu0 0.0
    %422 = vmatprep.subr.mxu0 0.0
    %423 = vmatpush1.msra.mxu0 0.0
    %424 = vmatprep.subr.mxu0 0.0
    %425 = vmatpush1.msra.mxu0 0.0
    %426 = vmatprep.subr.mxu0 0.0
    %427 = vmatpush1.msra.mxu0 0.0
    %428 = vmatprep.subr.mxu0 0.0
    %429 = vmatpush1.msra.mxu0 0.0
    %430 = vmatprep.subr.mxu0 0.0
    %431 = vmatpush1.msra.mxu0 0.0
    %432 = vmatprep.subr.mxu0 0.0
    %433 = vmatpush1.msra.mxu0 0.0
    %434 = vmatprep.subr.mxu0 0.0
    %435 = vmatpush1.msra.mxu0 0.0
    %436 = vmatprep.subr.mxu0 0.0
    %437 = vmatpush1.msra.mxu0 0.0
    %438 = vmatprep.subr.mxu0 0.0
    %439 = vmatpush1.msra.mxu0 0.0
    %440 = vmatprep.subr.mxu0 0.0
    %441 = vmatpush1.msra.mxu0 0.0
    %442 = vmatprep.subr.mxu0 0.0
    %443 = vmatpush1.msra.mxu0 0.0
    %444 = vmatprep.mubr.f32.mxu0 0.0
    %445 = vmatmul.mubr.f32.gmra.mrb[0].mxu0 %v378
    %v446 = vpop.f32.mrb[0].mxu0
    %v447 = vadd.f32 0.0, %v446
    %v448 = vpop.f32.mrb[0].mxu0
    %449 = vdwg.mxu0
    %v450 = vadd.f32 %v376, %v447
    %v451 = vtanh.pop %v450
    %s452 = scalar_lea.vmem [#allocation2], 10
    %v453 = vld [vmem:[%s452] sm:$0x3]
    %v455 = vsel %vm68, %v451, 0
    %457 = vmatprep.subr.mxu0 0.0
    %458 = vmatpush1.msra.mxu0 %v59
    %459 = vmatprep.subr.mxu0 0.0
    %460 = vmatpush1.msra.mxu0 %v60
    %461 = vmatprep.subr.mxu0 0.0
    %462 = vmatpush1.msra.mxu0 %v61
    %463 = vmatprep.subr.mxu0 0.0
    %464 = vmatpush1.msra.mxu0 %v62
    %465 = vmatprep.subr.mxu0 0.0
    %466 = vmatpush1.msra.mxu0 %v63
    %467 = vmatprep.subr.mxu0 0.0
    %468 = vmatpush1.msra.mxu0 %v64
    %469 = vmatprep.subr.mxu0 0.0
    %470 = vmatpush1.msra.mxu0 %v65
    %471 = vmatprep.subr.mxu0 0.0
    %472 = vmatpush1.msra.mxu0 %v66
    %473 = vmatprep.subr.mxu0 0.0
    %474 = vmatpush1.msra.mxu0 0.0
    %475 = vmatprep.subr.mxu0 0.0
    %476 = vmatpush1.msra.mxu0 0.0
    %477 = vmatprep.subr.mxu0 0.0
    %478 = vmatpush1.msra.mxu0 0.0
    %479 = vmatprep.subr.mxu0 0.0
    %480 = vmatpush1.msra.mxu0 0.0
    %481 = vmatprep.subr.mxu0 0.0
    %482 = vmatpush1.msra.mxu0 0.0
    %483 = vmatprep.subr.mxu0 0.0
    %484 = vmatpush1.msra.mxu0 0.0
    %485 = vmatprep.subr.mxu0 0.0
    %486 = vmatpush1.msra.mxu0 0.0
    %487 = vmatprep.subr.mxu0 0.0
    %488 = vmatpush1.msra.mxu0 0.0
    %489 = vmatprep.subr.mxu0 0.0
    %490 = vmatpush1.msra.mxu0 0.0
    %491 = vmatprep.subr.mxu0 0.0
    %492 = vmatpush1.msra.mxu0 0.0
    %493 = vmatprep.subr.mxu0 0.0
    %494 = vmatpush1.msra.mxu0 0.0
    %495 = vmatprep.subr.mxu0 0.0
    %496 = vmatpush1.msra.mxu0 0.0
    %497 = vmatprep.subr.mxu0 0.0
    %498 = vmatpush1.msra.mxu0 0.0
    %499 = vmatprep.subr.mxu0 0.0
    %500 = vmatpush1.msra.mxu0 0.0
    %501 = vmatprep.subr.mxu0 0.0
    %502 = vmatpush1.msra.mxu0 0.0
    %503 = vmatprep.subr.mxu0 0.0
    %504 = vmatpush1.msra.mxu0 0.0
    %505 = vmatprep.subr.mxu0 0.0
    %506 = vmatpush1.msra.mxu0 0.0
    %507 = vmatprep.subr.mxu0 0.0
    %508 = vmatpush1.msra.mxu0 0.0
    %509 = vmatprep.subr.mxu0 0.0
    %510 = vmatpush1.msra.mxu0 0.0
    %511 = vmatprep.subr.mxu0 0.0
    %512 = vmatpush1.msra.mxu0 0.0
    %513 = vmatprep.subr.mxu0 0.0
    %514 = vmatpush1.msra.mxu0 0.0
    %515 = vmatprep.subr.mxu0 0.0
    %516 = vmatpush1.msra.mxu0 0.0
    %517 = vmatprep.subr.mxu0 0.0
    %518 = vmatpush1.msra.mxu0 0.0
    %519 = vmatprep.subr.mxu0 0.0
    %520 = vmatpush1.msra.mxu0 0.0
    %521 = vmatprep.mubr.f32.mxu0 0.0
    %522 = vmatmul.mubr.f32.gmra.mrb[0].mxu0 %v455
    %v523 = vpop.f32.mrb[0].mxu0
    %v524 = vadd.f32 0.0, %v523
    %v525 = vpop.f32.mrb[0].mxu0
    %526 = vdwg.mxu0
    %v527 = vadd.f32 %v453, %v524
    %v528 = vtanh.pop %v527
    %s529 = scalar_lea.vmem [#allocation2], 12
    %v530 = vld [vmem:[%s529] sm:$0x3]
    %v532 = vsel %vm68, %v528, 0
    %534 = vmatprep.subr.mxu0 0.0
    %535 = vmatpush1.msra.mxu0 %v59
    %536 = vmatprep.subr.mxu0 0.0
    %537 = vmatpush1.msra.mxu0 %v60
    %538 = vmatprep.subr.mxu0 0.0
    %539 = vmatpush1.msra.mxu0 %v61
    %540 = vmatprep.subr.mxu0 0.0
    %541 = vmatpush1.msra.mxu0 %v62
    %542 = vmatprep.subr.mxu0 0.0
    %543 = vmatpush1.msra.mxu0 %v63
    %544 = vmatprep.subr.mxu0 0.0
    %545 = vmatpush1.msra.mxu0 %v64
    %546 = vmatprep.subr.mxu0 0.0
    %547 = vmatpush1.msra.mxu0 %v65
    %548 = vmatprep.subr.mxu0 0.0
    %549 = vmatpush1.msra.mxu0 %v66
    %550 = vmatprep.subr.mxu0 0.0
    %551 = vmatpush1.msra.mxu0 0.0
    %552 = vmatprep.subr.mxu0 0.0
    %553 = vmatpush1.msra.mxu0 0.0
    %554 = vmatprep.subr.mxu0 0.0
    %555 = vmatpush1.msra.mxu0 0.0
    %556 = vmatprep.subr.mxu0 0.0
    %557 = vmatpush1.msra.mxu0 0.0
    %558 = vmatprep.subr.mxu0 0.0
    %559 = vmatpush1.msra.mxu0 0.0
    %560 = vmatprep.subr.mxu0 0.0
    %561 = vmatpush1.msra.mxu0 0.0
    %562 = vmatprep.subr.mxu0 0.0
    %563 = vmatpush1.msra.mxu0 0.0
    %564 = vmatprep.subr.mxu0 0.0
    %565 = vmatpush1.msra.mxu0 0.0
    %566 = vmatprep.subr.mxu0 0.0
    %567 = vmatpush1.msra.mxu0 0.0
    %568 = vmatprep.subr.mxu0 0.0
    %569 = vmatpush1.msra.mxu0 0.0
    %570 = vmatprep.subr.mxu0 0.0
    %571 = vmatpush1.msra.mxu0 0.0
    %572 = vmatprep.subr.mxu0 0.0
    %573 = vmatpush1.msra.mxu0 0.0
    %574 = vmatprep.subr.mxu0 0.0
    %575 = vmatpush1.msra.mxu0 0.0
    %576 = vmatprep.subr.mxu0 0.0
    %577 = vmatpush1.msra.mxu0 0.0
    %578 = vmatprep.subr.mxu0 0.0
    %579 = vmatpush1.msra.mxu0 0.0
    %580 = vmatprep.subr.mxu0 0.0
    %581 = vmatpush1.msra.mxu0 0.0
    %582 = vmatprep.subr.mxu0 0.0
    %583 = vmatpush1.msra.mxu0 0.0
    %584 = vmatprep.subr.mxu0 0.0
    %585 = vmatpush1.msra.mxu0 0.0
    %586 = vmatprep.subr.mxu0 0.0
    %587 = vmatpush1.msra.mxu0 0.0
    %588 = vmatprep.subr.mxu0 0.0
    %589 = vmatpush1.msra.mxu0 0.0
    %590 = vmatprep.subr.mxu0 0.0
    %591 = vmatpush1.msra.mxu0 0.0
    %592 = vmatprep.subr.mxu0 0.0
    %593 = vmatpush1.msra.mxu0 0.0
    %594 = vmatprep.subr.mxu0 0.0
    %595 = vmatpush1.msra.mxu0 0.0
    %596 = vmatprep.subr.mxu0 0.0
    %597 = vmatpush1.msra.mxu0 0.0
    %598 = vmatprep.mubr.f32.mxu0 0.0
    %599 = vmatmul.mubr.f32.gmra.mrb[0].mxu0 %v532
    %v600 = vpop.f32.mrb[0].mxu0
    %v601 = vadd.f32 0.0, %v600
    %v602 = vpop.f32.mrb[0].mxu0
    %603 = vdwg.mxu0
    %v604 = vadd.f32 %v530, %v601
    %v605 = vtanh.pop %v604
    %s606 = scalar_lea.vmem [#allocation2], 14
    %v607 = vld [vmem:[%s606] sm:$0x3]
    %v609 = vsel %vm68, %v605, 0
    %611 = vmatprep.subr.mxu0 0.0
    %612 = vmatpush1.msra.mxu0 %v59
    %613 = vmatprep.subr.mxu0 0.0
    %614 = vmatpush1.msra.mxu0 %v60
    %615 = vmatprep.subr.mxu0 0.0
    %616 = vmatpush1.msra.mxu0 %v61
    %617 = vmatprep.subr.mxu0 0.0
    %618 = vmatpush1.msra.mxu0 %v62
    %619 = vmatprep.subr.mxu0 0.0
    %620 = vmatpush1.msra.mxu0 %v63
    %621 = vmatprep.subr.mxu0 0.0
    %622 = vmatpush1.msra.mxu0 %v64
    %623 = vmatprep.subr.mxu0 0.0
    %624 = vmatpush1.msra.mxu0 %v65
    %625 = vmatprep.subr.mxu0 0.0
    %626 = vmatpush1.msra.mxu0 %v66
    %627 = vmatprep.subr.mxu0 0.0
    %628 = vmatpush1.msra.mxu0 0.0
    %629 = vmatprep.subr.mxu0 0.0
    %630 = vmatpush1.msra.mxu0 0.0
    %631 = vmatprep.subr.mxu0 0.0
    %632 = vmatpush1.msra.mxu0 0.0
    %633 = vmatprep.subr.mxu0 0.0
    %634 = vmatpush1.msra.mxu0 0.0
    %635 = vmatprep.subr.mxu0 0.0
    %636 = vmatpush1.msra.mxu0 0.0
    %637 = vmatprep.subr.mxu0 0.0
    %638 = vmatpush1.msra.mxu0 0.0
    %639 = vmatprep.subr.mxu0 0.0
    %640 = vmatpush1.msra.mxu0 0.0
    %641 = vmatprep.subr.mxu0 0.0
    %642 = vmatpush1.msra.mxu0 0.0
    %643 = vmatprep.subr.mxu0 0.0
    %644 = vmatpush1.msra.mxu0 0.0
    %645 = vmatprep.subr.mxu0 0.0
    %646 = vmatpush1.msra.mxu0 0.0
    %647 = vmatprep.subr.mxu0 0.0
    %648 = vmatpush1.msra.mxu0 0.0
    %649 = vmatprep.subr.mxu0 0.0
    %650 = vmatpush1.msra.mxu0 0.0
    %651 = vmatprep.subr.mxu0 0.0
    %652 = vmatpush1.msra.mxu0 0.0
    %653 = vmatprep.subr.mxu0 0.0
    %654 = vmatpush1.msra.mxu0 0.0
    %655 = vmatprep.subr.mxu0 0.0
    %656 = vmatpush1.msra.mxu0 0.0
    %657 = vmatprep.subr.mxu0 0.0
    %658 = vmatpush1.msra.mxu0 0.0
    %659 = vmatprep.subr.mxu0 0.0
    %660 = vmatpush1.msra.mxu0 0.0
    %661 = vmatprep.subr.mxu0 0.0
    %662 = vmatpush1.msra.mxu0 0.0
    %663 = vmatprep.subr.mxu0 0.0
    %664 = vmatpush1.msra.mxu0 0.0
    %665 = vmatprep.subr.mxu0 0.0
    %666 = vmatpush1.msra.mxu0 0.0
    %667 = vmatprep.subr.mxu0 0.0
    %668 = vmatpush1.msra.mxu0 0.0
    %669 = vmatprep.subr.mxu0 0.0
    %670 = vmatpush1.msra.mxu0 0.0
    %671 = vmatprep.subr.mxu0 0.0
    %672 = vmatpush1.msra.mxu0 0.0
    %673 = vmatprep.subr.mxu0 0.0
    %674 = vmatpush1.msra.mxu0 0.0
    %675 = vmatprep.mubr.f32.mxu0 0.0
    %676 = vmatmul.mubr.f32.gmra.mrb[0].mxu0 %v609
    %v677 = vpop.f32.mrb[0].mxu0
    %v678 = vadd.f32 0.0, %v677
    %v679 = vpop.f32.mrb[0].mxu0
    %680 = vdwg.mxu0
    %v681 = vadd.f32 %v607, %v678
    %v682 = vtanh.pop %v681
    %v683 = vld [vmem:[#allocation7] sm:$0xff]
    %v684 = vld [vmem:[#allocation7 + $0x8] sm:$0xff]
    %v685 = vld [vmem:[#allocation7 + $0x10] sm:$0xff]
    %v686 = vld [vmem:[#allocation7 + $0x18] sm:$0xff]
    %v687 = vld [vmem:[#allocation7 + $0x20] sm:$0xff]
    %v688 = vld [vmem:[#allocation7 + $0x28] sm:$0xff]
    %v689 = vld [vmem:[#allocation7 + $0x30] sm:$0xff]
    %v690 = vld [vmem:[#allocation7 + $0x38] sm:$0xff]
    %v691 = vld [vmem:[#allocation7 + $0x40] sm:$0xff]
    %v692 = vld [vmem:[#allocation7 + $0x48] sm:$0xff]
    %v693 = vld [vmem:[#allocation7 + $0x50] sm:$0xff]
    %v694 = vld [vmem:[#allocation7 + $0x58] sm:$0xff]
    %v695 = vld [vmem:[#allocation7 + $0x60] sm:$0xff]
    %v696 = vld [vmem:[#allocation7 + $0x68] sm:$0xff]
    %v697 = vld [vmem:[#allocation7 + $0x70] sm:$0xff]
    %v698 = vld [vmem:[#allocation7 + $0x78] sm:$0xff]
    %v699 = vld [vmem:[#allocation7 + $0x80] sm:$0xff]
    %v700 = vld [vmem:[#allocation7 + $0x88] sm:$0xff]
    %v701 = vld [vmem:[#allocation7 + $0x90] sm:$0xff]
    %v702 = vld [vmem:[#allocation7 + $0x98] sm:$0xff]
    %v703 = vld [vmem:[#allocation7 + $0xa0] sm:$0xff]
    %v704 = vld [vmem:[#allocation7 + $0xa8] sm:$0xff]
    %v705 = vld [vmem:[#allocation7 + $0xb0] sm:$0xff]
    %v706 = vld [vmem:[#allocation7 + $0xb8] sm:$0xff]
    %v707 = vld [vmem:[#allocation7 + $0xc0] sm:$0xff]
    %v708 = vld [vmem:[#allocation7 + $0xc8] sm:$0xff]
    %v709 = vld [vmem:[#allocation7 + $0xd0] sm:$0xff]
    %v710 = vld [vmem:[#allocation7 + $0xd8] sm:$0xff]
    %v711 = vld [vmem:[#allocation7 + $0xe0] sm:$0xff]
    %v712 = vld [vmem:[#allocation7 + $0xe8] sm:$0xff]
    %v713 = vld [vmem:[#allocation7 + $0xf0] sm:$0xff]
    %v714 = vld [vmem:[#allocation7 + $0xf8] sm:$0xff]
    %v715 = vld [vmem:[#allocation7 + $0x100] sm:$0xff]
    %v716 = vld [vmem:[#allocation7 + $0x108] sm:$0xff]
    %v717 = vld [vmem:[#allocation7 + $0x110] sm:$0xff]
    %v718 = vld [vmem:[#allocation7 + $0x118] sm:$0xff]
    %v719 = vld [vmem:[#allocation7 + $0x120] sm:$0xff]
    %v720 = vld [vmem:[#allocation7 + $0x128] sm:$0xff]
    %v721 = vld [vmem:[#allocation7 + $0x130] sm:$0xff]
    %v722 = vld [vmem:[#allocation7 + $0x138] sm:$0xff]
    %v723 = vld [vmem:[#allocation7 + $0x140] sm:$0xff]
    %v724 = vld [vmem:[#allocation7 + $0x148] sm:$0xff]
    %v725 = vld [vmem:[#allocation7 + $0x150] sm:$0xff]
    %v726 = vld [vmem:[#allocation7 + $0x158] sm:$0xff]
    %v727 = vld [vmem:[#allocation7 + $0x160] sm:$0xff]
    %v728 = vld [vmem:[#allocation7 + $0x168] sm:$0xff]
    %v729 = vld [vmem:[#allocation7 + $0x170] sm:$0xff]
    %v730 = vld [vmem:[#allocation7 + $0x178] sm:$0xff]
    %v731 = vld [vmem:[%s3] sm:$0x3f]
    %v733 = vlaneseq
    %v734 = vshrl.u32 %v733, 7
    %v735 = vsub.s32 0, %v734
    %v736 = vrot.slane %v731, %v735
    %v737 = vlaneseq
    %v738 = vshrl.u32 %v737, 7
    %v739 = vsub.s32 1, %v738
    %v740 = vrot.slane %v731, %v739
    %v741 = vlaneseq
    %v742 = vshrl.u32 %v741, 7
    %v743 = vsub.s32 2, %v742
    %v744 = vrot.slane %v731, %v743
    %v745 = vlaneseq
    %v746 = vshrl.u32 %v745, 7
    %v747 = vsub.s32 3, %v746
    %v748 = vrot.slane %v731, %v747
    %v749 = vlaneseq
    %v750 = vshrl.u32 %v749, 7
    %v751 = vsub.s32 4, %v750
    %v752 = vrot.slane %v731, %v751
    %v753 = vlaneseq
    %v754 = vshrl.u32 %v753, 7
    %v755 = vsub.s32 5, %v754
    %v756 = vrot.slane %v731, %v755
    %v764 = vsel %vm68, %v682, 0
    %766 = vmatprep.subr.mxu0 %v684
    %767 = vmatpush1.msra.mxu0 %v683
    %768 = vmatprep.subr.mxu0 %v690
    %769 = vmatpush1.msra.mxu0 %v689
    %770 = vmatprep.subr.mxu0 %v696
    %771 = vmatpush1.msra.mxu0 %v695
    %772 = vmatprep.subr.mxu0 %v702
    %773 = vmatpush1.msra.mxu0 %v701
    %774 = vmatprep.subr.mxu0 %v708
    %775 = vmatpush1.msra.mxu0 %v707
    %776 = vmatprep.subr.mxu0 %v714
    %777 = vmatpush1.msra.mxu0 %v713
    %778 = vmatprep.subr.mxu0 %v720
    %779 = vmatpush1.msra.mxu0 %v719
    %780 = vmatprep.subr.mxu0 %v726
    %781 = vmatpush1.msra.mxu0 %v725
    %782 = vmatprep.subr.mxu0 0.0
    %783 = vmatpush1.msra.mxu0 0.0
    %784 = vmatprep.subr.mxu0 0.0
    %785 = vmatpush1.msra.mxu0 0.0
    %786 = vmatprep.subr.mxu0 0.0
    %787 = vmatpush1.msra.mxu0 0.0
    %788 = vmatprep.subr.mxu0 0.0
    %789 = vmatpush1.msra.mxu0 0.0
    %790 = vmatprep.subr.mxu0 0.0
    %791 = vmatpush1.msra.mxu0 0.0
    %792 = vmatprep.subr.mxu0 0.0
    %793 = vmatpush1.msra.mxu0 0.0
    %794 = vmatprep.subr.mxu0 0.0
    %795 = vmatpush1.msra.mxu0 0.0
    %796 = vmatprep.subr.mxu0 0.0
    %797 = vmatpush1.msra.mxu0 0.0
    %798 = vmatprep.subr.mxu0 0.0
    %799 = vmatpush1.msra.mxu0 0.0
    %800 = vmatprep.subr.mxu0 0.0
    %801 = vmatpush1.msra.mxu0 0.0
    %802 = vmatprep.subr.mxu0 0.0
    %803 = vmatpush1.msra.mxu0 0.0
    %804 = vmatprep.subr.mxu0 0.0
    %805 = vmatpush1.msra.mxu0 0.0
    %806 = vmatprep.subr.mxu0 0.0
    %807 = vmatpush1.msra.mxu0 0.0
    %808 = vmatprep.subr.mxu0 0.0
    %809 = vmatpush1.msra.mxu0 0.0
    %810 = vmatprep.subr.mxu0 0.0
    %811 = vmatpush1.msra.mxu0 0.0
    %812 = vmatprep.subr.mxu0 0.0
    %813 = vmatpush1.msra.mxu0 0.0
    %814 = vmatprep.subr.mxu0 0.0
    %815 = vmatpush1.msra.mxu0 0.0
    %816 = vmatprep.subr.mxu0 0.0
    %817 = vmatpush1.msra.mxu0 0.0
    %818 = vmatprep.subr.mxu0 0.0
    %819 = vmatpush1.msra.mxu0 0.0
    %820 = vmatprep.subr.mxu0 0.0
    %821 = vmatpush1.msra.mxu0 0.0
    %822 = vmatprep.subr.mxu0 0.0
    %823 = vmatpush1.msra.mxu0 0.0
    %824 = vmatprep.subr.mxu0 0.0
    %825 = vmatpush1.msra.mxu0 0.0
    %826 = vmatprep.subr.mxu0 0.0
    %827 = vmatpush1.msra.mxu0 0.0
    %828 = vmatprep.subr.mxu0 0.0
    %829 = vmatpush1.msra.mxu0 0.0
    %830 = vmatprep.mubr.f32.mxu0 0.0
    %831 = vmatmul.mubr.f32.gmra.mrb[0].mxu0 %v764
    %v832 = vpop.f32.mrb[0].mxu0
    %v833 = vadd.f32 %v736, %v832
    %v834 = vpop.f32.mrb[0].mxu0
    %v835 = vadd.f32 %v740, %v834
    %836 = vdwg.mxu0
    %837 = vmatprep.subr.mxu0 %v686
    %838 = vmatpush1.msra.mxu0 %v685
    %839 = vmatprep.subr.mxu0 %v692
    %840 = vmatpush1.msra.mxu0 %v691
    %841 = vmatprep.subr.mxu0 %v698
    %842 = vmatpush1.msra.mxu0 %v697
    %843 = vmatprep.subr.mxu0 %v704
    %844 = vmatpush1.msra.mxu0 %v703
    %845 = vmatprep.subr.mxu0 %v710
    %846 = vmatpush1.msra.mxu0 %v709
    %847 = vmatprep.subr.mxu0 %v716
    %848 = vmatpush1.msra.mxu0 %v715
    %849 = vmatprep.subr.mxu0 %v722
    %850 = vmatpush1.msra.mxu0 %v721
    %851 = vmatprep.subr.mxu0 %v728
    %852 = vmatpush1.msra.mxu0 %v727
    %853 = vmatprep.subr.mxu0 0.0
    %854 = vmatpush1.msra.mxu0 0.0
    %855 = vmatprep.subr.mxu0 0.0
    %856 = vmatpush1.msra.mxu0 0.0
    %857 = vmatprep.subr.mxu0 0.0
    %858 = vmatpush1.msra.mxu0 0.0
    %859 = vmatprep.subr.mxu0 0.0
    %860 = vmatpush1.msra.mxu0 0.0
    %861 = vmatprep.subr.mxu0 0.0
    %862 = vmatpush1.msra.mxu0 0.0
    %863 = vmatprep.subr.mxu0 0.0
    %864 = vmatpush1.msra.mxu0 0.0
    %865 = vmatprep.subr.mxu0 0.0
    %866 = vmatpush1.msra.mxu0 0.0
    %867 = vmatprep.subr.mxu0 0.0
    %868 = vmatpush1.msra.mxu0 0.0
    %869 = vmatprep.subr.mxu0 0.0
    %870 = vmatpush1.msra.mxu0 0.0
    %871 = vmatprep.subr.mxu0 0.0
    %872 = vmatpush1.msra.mxu0 0.0
    %873 = vmatprep.subr.mxu0 0.0
    %874 = vmatpush1.msra.mxu0 0.0
    %875 = vmatprep.subr.mxu0 0.0
    %876 = vmatpush1.msra.mxu0 0.0
    %877 = vmatprep.subr.mxu0 0.0
    %878 = vmatpush1.msra.mxu0 0.0
    %879 = vmatprep.subr.mxu0 0.0
    %880 = vmatpush1.msra.mxu0 0.0
    %881 = vmatprep.subr.mxu0 0.0
    %882 = vmatpush1.msra.mxu0 0.0
    %883 = vmatprep.subr.mxu0 0.0
    %884 = vmatpush1.msra.mxu0 0.0
    %885 = vmatprep.subr.mxu0 0.0
    %886 = vmatpush1.msra.mxu0 0.0
    %887 = vmatprep.subr.mxu0 0.0
    %888 = vmatpush1.msra.mxu0 0.0
    %889 = vmatprep.subr.mxu0 0.0
    %890 = vmatpush1.msra.mxu0 0.0
    %891 = vmatprep.subr.mxu0 0.0
    %892 = vmatpush1.msra.mxu0 0.0
    %893 = vmatprep.subr.mxu0 0.0
    %894 = vmatpush1.msra.mxu0 0.0
    %895 = vmatprep.subr.mxu0 0.0
    %896 = vmatpush1.msra.mxu0 0.0
    %897 = vmatprep.subr.mxu0 0.0
    %898 = vmatpush1.msra.mxu0 0.0
    %899 = vmatprep.subr.mxu0 0.0
    %900 = vmatpush1.msra.mxu0 0.0
    %901 = vmatprep.mubr.f32.mxu0 0.0
    %902 = vmatmul.mubr.f32.gmra.mrb[0].mxu0 %v764
    %v903 = vpop.f32.mrb[0].mxu0
    %v904 = vadd.f32 %v744, %v903
    %v905 = vpop.f32.mrb[0].mxu0
    %v906 = vadd.f32 %v748, %v905
    %907 = vdwg.mxu0
    %908 = vmatprep.subr.mxu0 %v688
    %909 = vmatpush1.msra.mxu0 %v687
    %910 = vmatprep.subr.mxu0 %v694
    %911 = vmatpush1.msra.mxu0 %v693
    %912 = vmatprep.subr.mxu0 %v700
    %913 = vmatpush1.msra.mxu0 %v699
    %914 = vmatprep.subr.mxu0 %v706
    %915 = vmatpush1.msra.mxu0 %v705
    %916 = vmatprep.subr.mxu0 %v712
    %917 = vmatpush1.msra.mxu0 %v711
    %918 = vmatprep.subr.mxu0 %v718
    %919 = vmatpush1.msra.mxu0 %v717
    %920 = vmatprep.subr.mxu0 %v724
    %921 = vmatpush1.msra.mxu0 %v723
    %922 = vmatprep.subr.mxu0 %v730
    %923 = vmatpush1.msra.mxu0 %v729
    %924 = vmatprep.subr.mxu0 0.0
    %925 = vmatpush1.msra.mxu0 0.0
    %926 = vmatprep.subr.mxu0 0.0
    %927 = vmatpush1.msra.mxu0 0.0
    %928 = vmatprep.subr.mxu0 0.0
    %929 = vmatpush1.msra.mxu0 0.0
    %930 = vmatprep.subr.mxu0 0.0
    %931 = vmatpush1.msra.mxu0 0.0
    %932 = vmatprep.subr.mxu0 0.0
    %933 = vmatpush1.msra.mxu0 0.0
    %934 = vmatprep.subr.mxu0 0.0
    %935 = vmatpush1.msra.mxu0 0.0
    %936 = vmatprep.subr.mxu0 0.0
    %937 = vmatpush1.msra.mxu0 0.0
    %938 = vmatprep.subr.mxu0 0.0
    %939 = vmatpush1.msra.mxu0 0.0
    %940 = vmatprep.subr.mxu0 0.0
    %941 = vmatpush1.msra.mxu0 0.0
    %942 = vmatprep.subr.mxu0 0.0
    %943 = vmatpush1.msra.mxu0 0.0
    %944 = vmatprep.subr.mxu0 0.0
    %945 = vmatpush1.msra.mxu0 0.0
    %946 = vmatprep.subr.mxu0 0.0
    %947 = vmatpush1.msra.mxu0 0.0
    %948 = vmatprep.subr.mxu0 0.0
    %949 = vmatpush1.msra.mxu0 0.0
    %950 = vmatprep.subr.mxu0 0.0
    %951 = vmatpush1.msra.mxu0 0.0
    %952 = vmatprep.subr.mxu0 0.0
    %953 = vmatpush1.msra.mxu0 0.0
    %954 = vmatprep.subr.mxu0 0.0
    %955 = vmatpush1.msra.mxu0 0.0
    %956 = vmatprep.subr.mxu0 0.0
    %957 = vmatpush1.msra.mxu0 0.0
    %958 = vmatprep.subr.mxu0 0.0
    %959 = vmatpush1.msra.mxu0 0.0
    %960 = vmatprep.subr.mxu0 0.0
    %961 = vmatpush1.msra.mxu0 0.0
    %962 = vmatprep.subr.mxu0 0.0
    %963 = vmatpush1.msra.mxu0 0.0
    %964 = vmatprep.subr.mxu0 0.0
    %965 = vmatpush1.msra.mxu0 0.0
    %966 = vmatprep.subr.mxu0 0.0
    %967 = vmatpush1.msra.mxu0 0.0
    %968 = vmatprep.subr.mxu0 0.0
    %969 = vmatpush1.msra.mxu0 0.0
    %970 = vmatprep.subr.mxu0 0.0
    %971 = vmatpush1.msra.mxu0 0.0
    %972 = vmatprep.mubr.f32.mxu0 0.0
    %973 = vmatmul.mubr.f32.gmra.mrb[0].mxu0 %v764
    %v974 = vpop.f32.mrb[0].mxu0
    %v975 = vadd.f32 %v752, %v974
    %v976 = vpop.f32.mrb[0].mxu0
    %v977 = vadd.f32 %v756, %v976
    %978 = vdwg.mxu0
    %v985 = vcombine.low %v833, %v835
    %v986 = vcombine.low %v904, %v906
    %v988 = vunpack.c.l.s4 1983009808
    %v989 = vunpack.c.0.s8 %v988
    %v990 = vlaneseq
    %v991 = vshrl.u32 %v990, 7
    %v992 = vsub.s32 %v989, %v991
    %v993 = vrot.slane %v985, %v992
    %v995 = vunpack.c.l.s4 1983009808
    %v996 = vunpack.c.0.s8 %v995
    %v997 = vlaneseq
    %v998 = vshrl.u32 %v997, 7
    %v999 = vsub.s32 %v996, %v998
    %v1000 = vrot.slane %v986, %v999
    %v1001 = vcombine.low %v993, %v1000
    %v1002 = vcombine.low %v975, %v977
    %v1004 = vunpack.c.l.s4 1983009808
    %v1005 = vunpack.c.0.s8 %v1004
    %v1006 = vlaneseq
    %v1007 = vshrl.u32 %v1006, 7
    %v1008 = vsub.s32 %v1005, %v1007
    %v1009 = vrot.slane %v1002, %v1008
    %1012 = vst [vmem:[#allocation8] sm:$0xff] %v1001
    %1013 = vst [vmem:[#allocation8 + $0x8] sm:$0xf] %v1009
    // Predicated region
    $region30: #{tpu_custom_call.1} parent=1 // pred_check
      _
    $region31: #{tpu_custom_call.1} parent=1 // pred_check_branch
      %1015 = sbr.rel (0) target = $region33
    $region32: #{tpu_custom_call.1} parent=1 // pred_region
      %s1017 = ssub.s32 192, 192
      %1018 = vsyncadd [#allocation4], %s1017
      %s1020 = sshll.u32 [#allocation8], 4
      %s1021 = int_to_ptr.vmem [resolvable:$true] %s1020
      %1023 = dma.vmem_to_hbm [thread:$0]  %s1021, 192, %s4, [#allocation4]
    $region33: #{tpu_custom_call.1} parent=1 // pred_fallthru
      _
    // Predicated region
    $region34: #{tpu_custom_call.1} parent=1 // pred_check
      _
    $region35: #{tpu_custom_call.1} parent=1 // pred_check_branch
      %1025 = sbr.rel (0) target = $region37
    $region36: #{tpu_custom_call.1} parent=1 // pred_region
      %1026 = dma.done [#allocation4], 192
    $region37: #{tpu_custom_call.1} parent=1 // pred_fallthru
      _
    %1027 = vsyncpa [#allocation3], 1
    %1028 = vsyncpa [#allocation6], 1
    %1029 = vsyncpa [#allocation4], 1

</llo_original>
